<compile_context>
chip_gen: v6e
topology: v6e:2x2x1
jax: 0.10.0
libtpu: 0.0.40
codegen_flags: <defaults>
</compile_context>

<pallas_src>
import functools
import math

import jax
import jax.numpy as jnp
from jax.experimental import pallas as pl
from jax.experimental.pallas import tpu as pltpu


def causal_conv_kernel(x_ref, w_ref, b_ref, o_ref, *, tb, L, K, dilation, neg_slope):
    """One batch tile: causal conv1d (K accumulating matmuls) + bias + leaky ReLU.

    x_ref : (tb, c_in, L + pad)   pre-padded activations, time on lanes
    w_ref : (K, c_out, c_in)      per-tap weights (resident: constant index_map)
    b_ref : (c_out, 1)            bias, f32
    o_ref : (tb, c_out, L)        output in the PyTorch layout, time on lanes
    """
    bias = b_ref[...].astype(jnp.float32)                     # (c_out, 1)
    for b in range(tb):                                       # static unroll, tb small
        acc = None
        for k in range(K):                                    # static unroll over taps
            xk = x_ref[b, :, pl.ds(k * dilation, L)]          # (c_in, L) static slice
            wk = w_ref[k]                                      # (c_out, c_in)
            yk = jnp.dot(wk, xk, preferred_element_type=jnp.float32)  # (c_out, L)
            acc = yk if acc is None else acc + yk
        y = acc + bias                                         # broadcast along lanes
        y = jnp.maximum(y, neg_slope * y)                      # leaky_relu(0.01)
        o_ref[b] = y.astype(o_ref.dtype)                       # lane-dense over L


def causal_conv1d_embedding(x, weight, bias, *, dilation=1, negative_slope=0.01,
                            tb=None, matmul_dtype=None):
    """x: (B, C_in, L); weight: (C_out, C_in, K); bias: (C_out,) -> (B, C_out, L)."""
    B, c_in, L = x.shape
    c_out, c_in_w, K = weight.shape
    assert c_in_w == c_in
    pad = (K - 1) * dilation
    Lp = L + pad

    out_dtype = x.dtype
    op_dtype = jnp.dtype(matmul_dtype) if matmul_dtype is not None else jnp.dtype(x.dtype)
    op_isz = op_dtype.itemsize
    out_isz = jnp.dtype(out_dtype).itemsize

    def block_bytes(t):
        return t * c_in * Lp * op_isz + t * c_out * L * out_isz

    # Batch tile: largest divisor of B (capped to bound unrolling) whose x+out blocks
    # fit the per-step VMEM budget (~2x with double buffering).  No forced >=2-step
    # split: on single-TC v5e/v6e fewer, bigger steps are strictly better.
    if tb is None:
        budget = 16 * 1024 * 1024
        tb = 1
        for cand in range(min(B, 8), 0, -1):
            if B % cand == 0 and block_bytes(cand) <= budget:
                tb = cand
                break
    assert B % tb == 0, "batch tile must divide batch"

    # Wrapper-side prep (each a single cheap pass / tiny tensor, no activation
    # transposes): causal left-pad once; weights to (K, c_out, c_in); bias to 2-D.
    x_op = x.astype(op_dtype)
    x_pad = jnp.pad(x_op, ((0, 0), (0, 0), (pad, 0)))             # (B, c_in, Lp)
    w_t = jnp.transpose(weight, (2, 0, 1)).astype(op_dtype)       # (K, c_out, c_in)
    b2d = bias.astype(jnp.float32).reshape(c_out, 1)              # (c_out, 1)

    kernel = functools.partial(
        causal_conv_kernel, tb=tb, L=L, K=K, dilation=dilation,
        neg_slope=negative_slope)

    # Explicit VMEM limit: enough for the chosen blocks (double-buffered) but capped
    # well under v7x's 64 MiB physical VMEM.
    vmem_limit = int(min(48 * 2**20, max(32 * 2**20, 4 * block_bytes(tb))))

    return pl.pallas_call(
        kernel,
        out_shape=jax.ShapeDtypeStruct((B, c_out, L), out_dtype),
        grid=(B // tb,),
        in_specs=[
            pl.BlockSpec((tb, c_in, Lp), lambda b: (b, 0, 0)),      # activations
            pl.BlockSpec((K, c_out, c_in), lambda b: (0, 0, 0)),    # taps (resident)
            pl.BlockSpec((c_out, 1), lambda b: (0, 0)),             # bias (resident)
        ],
        out_specs=pl.BlockSpec((tb, c_out, L), lambda b: (b, 0, 0)),
        compiler_params=pltpu.CompilerParams(
            dimension_semantics=("parallel",),
            vmem_limit_bytes=vmem_limit),
    )(x_pad, w_t, b2d)


# ---------------- pure-JAX reference (for verification) ----------------
def reference(x, weight, bias, dilation, negative_slope=0.01):
    B, c_in, L = x.shape
    c_out, _, K = weight.shape
    pad = (K - 1) * dilation
    xp = jnp.pad(x, ((0, 0), (0, 0), (pad, 0)))
    y = jnp.zeros((B, c_out, L), jnp.float32)
    for k in range(K):
        y = y + jnp.einsum("oc,bcl->bol", weight[:, :, k],
                           xp[:, :, k * dilation:k * dilation + L])
    y = y + bias[None, :, None]
    return jnp.where(y >= 0.0, y, negative_slope * y)


if __name__ == "__main__":
    B, C_IN, C_OUT, L, K, DIL = 2, 4, 32, 16, 3, 1

    key = jax.random.PRNGKey(0)
    kx, kw, kb = jax.random.split(key, 3)

    x = jax.random.normal(kx, (B, C_IN, L), jnp.float32)
    bound = 1.0 / math.sqrt(C_IN * K)          # PyTorch Conv1d default init range
    weight = jax.random.uniform(kw, (C_OUT, C_IN, K), jnp.float32, -bound, bound)
    bias = jax.random.uniform(kb, (C_OUT,), jnp.float32, -bound, bound)

    ref = reference(x, weight, bias, DIL)

    # f32 path (exact check).
    out = causal_conv1d_embedding(x, weight, bias, dilation=DIL)
    out = jax.block_until_ready(out)
    assert out.shape == (B, C_OUT, L)
    assert jnp.allclose(out, ref, atol=1e-5, rtol=1e-5), "f32 kernel mismatch vs reference"

    # bf16 MXU-operand path (perf option for v6e/v7x); f32 accumulation, looser check.
    out_bf = causal_conv1d_embedding(x, weight, bias, dilation=DIL,
                                     matmul_dtype=jnp.bfloat16)
    out_bf = jax.block_until_ready(out_bf)
    assert jnp.allclose(out_bf, ref, atol=5e-2, rtol=5e-2), "bf16 kernel mismatch vs reference"

    print("KERNEL_OK")
</pallas_src>

<mosaic_0001>
module attributes {stable_mosaic.version = 11 : i64} {
  func.func @causal_conv_kernel(%arg0: i32, %arg1: memref<2x4x18xf32, #tpu.memory_space<vmem>>, %arg2: memref<3x32x4xf32, #tpu.memory_space<vmem>>, %arg3: memref<32x1xf32, #tpu.memory_space<vmem>>, %arg4: memref<2x32x16xf32, #tpu.memory_space<vmem>>) attributes {dimension_semantics = [#tpu.dimension_semantics<parallel>], iteration_bounds = array<i64: 1>, scalar_prefetch = 0 : i64, scratch_operands = 0 : i64, tpu.core_type = #tpu.core_type<tc>, window_params = [{transform_indices = @transform_0, window_bounds = array<i64: 2, 4, 18>}, {pipeline_mode = #tpu.pipeline_mode<synchronous>, transform_indices = @transform_1, window_bounds = array<i64: 3, 32, 4>}, {pipeline_mode = #tpu.pipeline_mode<synchronous>, transform_indices = @transform_2, window_bounds = array<i64: 32, 1>}, {transform_indices = @transform_3, window_bounds = array<i64: 2, 32, 16>}]} {
    %c0 = arith.constant 0 : index
    %c0_0 = arith.constant 0 : index
    %0 = vector.load %arg3[%c0, %c0_0] : memref<32x1xf32, #tpu.memory_space<vmem>>, vector<32x1xf32>
    %c0_1 = arith.constant 0 : index
    %c0_2 = arith.constant 0 : index
    %c0_3 = arith.constant 0 : index
    %1 = vector.load %arg1[%c0_1, %c0_2, %c0_3] : memref<2x4x18xf32, #tpu.memory_space<vmem>>, vector<1x4x16xf32>
    %2 = vector.shape_cast %1 : vector<1x4x16xf32> to vector<4x16xf32>
    %c0_4 = arith.constant 0 : index
    %c0_5 = arith.constant 0 : index
    %c0_6 = arith.constant 0 : index
    %3 = vector.load %arg2[%c0_4, %c0_5, %c0_6] : memref<3x32x4xf32, #tpu.memory_space<vmem>>, vector<1x32x4xf32>
    %4 = vector.shape_cast %3 : vector<1x32x4xf32> to vector<32x4xf32>
    %cst = arith.constant dense<0.000000e+00> : vector<32x16xf32>
    %5 = tpu.matmul %4, %2, %cst {dimension_numbers = #tpu.dot_dimension_numbers<[1], [0], [0], [1], [0, 0, 1, 1], [], []>} : vector<32x4xf32>, vector<4x16xf32>, vector<32x16xf32> -> vector<32x16xf32>
    %c0_7 = arith.constant 0 : index
    %c0_8 = arith.constant 0 : index
    %c1 = arith.constant 1 : index
    %6 = vector.load %arg1[%c0_7, %c0_8, %c1] : memref<2x4x18xf32, #tpu.memory_space<vmem>>, vector<1x4x16xf32>
    %7 = vector.shape_cast %6 : vector<1x4x16xf32> to vector<4x16xf32>
    %c1_9 = arith.constant 1 : index
    %c0_10 = arith.constant 0 : index
    %c0_11 = arith.constant 0 : index
    %8 = vector.load %arg2[%c1_9, %c0_10, %c0_11] : memref<3x32x4xf32, #tpu.memory_space<vmem>>, vector<1x32x4xf32>
    %9 = vector.shape_cast %8 : vector<1x32x4xf32> to vector<32x4xf32>
    %cst_12 = arith.constant dense<0.000000e+00> : vector<32x16xf32>
    %10 = tpu.matmul %9, %7, %cst_12 {dimension_numbers = #tpu.dot_dimension_numbers<[1], [0], [0], [1], [0, 0, 1, 1], [], []>} : vector<32x4xf32>, vector<4x16xf32>, vector<32x16xf32> -> vector<32x16xf32>
    %11 = arith.addf %5, %10 : vector<32x16xf32>
    %c0_13 = arith.constant 0 : index
    %c0_14 = arith.constant 0 : index
    %c2 = arith.constant 2 : index
    %12 = vector.load %arg1[%c0_13, %c0_14, %c2] : memref<2x4x18xf32, #tpu.memory_space<vmem>>, vector<1x4x16xf32>
    %13 = vector.shape_cast %12 : vector<1x4x16xf32> to vector<4x16xf32>
    %c2_15 = arith.constant 2 : index
    %c0_16 = arith.constant 0 : index
    %c0_17 = arith.constant 0 : index
    %14 = vector.load %arg2[%c2_15, %c0_16, %c0_17] : memref<3x32x4xf32, #tpu.memory_space<vmem>>, vector<1x32x4xf32>
    %15 = vector.shape_cast %14 : vector<1x32x4xf32> to vector<32x4xf32>
    %cst_18 = arith.constant dense<0.000000e+00> : vector<32x16xf32>
    %16 = tpu.matmul %15, %13, %cst_18 {dimension_numbers = #tpu.dot_dimension_numbers<[1], [0], [0], [1], [0, 0, 1, 1], [], []>} : vector<32x4xf32>, vector<4x16xf32>, vector<32x16xf32> -> vector<32x16xf32>
    %17 = arith.addf %11, %16 : vector<32x16xf32>
    %18 = vector.broadcast %0 : vector<32x1xf32> to vector<32x16xf32>
    %19 = arith.addf %17, %18 : vector<32x16xf32>
    %cst_19 = arith.constant 0.00999999977 : f32
    %20 = vector.broadcast %cst_19 : f32 to vector<32x16xf32>
    %21 = arith.mulf %20, %19 : vector<32x16xf32>
    %22 = arith.maximumf %19, %21 : vector<32x16xf32>
    %c0_20 = arith.constant 0 : index
    %c0_21 = arith.constant 0 : index
    %c0_22 = arith.constant 0 : index
    %23 = vector.load %arg4[%c0_20, %c0_21, %c0_22] : memref<2x32x16xf32, #tpu.memory_space<vmem>>, vector<1x32x16xf32>
    %24 = vector.shape_cast %23 : vector<1x32x16xf32> to vector<32x16xf32>
    %25 = vector.shape_cast %22 : vector<32x16xf32> to vector<1x32x16xf32>
    tpu.vector_store %arg4[%c0_20, %c0_21, %c0_22], %25 {strides = array<i32>} : memref<2x32x16xf32, #tpu.memory_space<vmem>>, vector<1x32x16xf32>,
    %c1_23 = arith.constant 1 : index
    %c0_24 = arith.constant 0 : index
    %c0_25 = arith.constant 0 : index
    %26 = vector.load %arg1[%c1_23, %c0_24, %c0_25] : memref<2x4x18xf32, #tpu.memory_space<vmem>>, vector<1x4x16xf32>
    %27 = vector.shape_cast %26 : vector<1x4x16xf32> to vector<4x16xf32>
    %c0_26 = arith.constant 0 : index
    %c0_27 = arith.constant 0 : index
    %c0_28 = arith.constant 0 : index
    %28 = vector.load %arg2[%c0_26, %c0_27, %c0_28] : memref<3x32x4xf32, #tpu.memory_space<vmem>>, vector<1x32x4xf32>
    %29 = vector.shape_cast %28 : vector<1x32x4xf32> to vector<32x4xf32>
    %cst_29 = arith.constant dense<0.000000e+00> : vector<32x16xf32>
    %30 = tpu.matmul %29, %27, %cst_29 {dimension_numbers = #tpu.dot_dimension_numbers<[1], [0], [0], [1], [0, 0, 1, 1], [], []>} : vector<32x4xf32>, vector<4x16xf32>, vector<32x16xf32> -> vector<32x16xf32>
    %c1_30 = arith.constant 1 : index
    %c0_31 = arith.constant 0 : index
    %c1_32 = arith.constant 1 : index
    %31 = vector.load %arg1[%c1_30, %c0_31, %c1_32] : memref<2x4x18xf32, #tpu.memory_space<vmem>>, vector<1x4x16xf32>
    %32 = vector.shape_cast %31 : vector<1x4x16xf32> to vector<4x16xf32>
    %c1_33 = arith.constant 1 : index
    %c0_34 = arith.constant 0 : index
    %c0_35 = arith.constant 0 : index
    %33 = vector.load %arg2[%c1_33, %c0_34, %c0_35] : memref<3x32x4xf32, #tpu.memory_space<vmem>>, vector<1x32x4xf32>
    %34 = vector.shape_cast %33 : vector<1x32x4xf32> to vector<32x4xf32>
    %cst_36 = arith.constant dense<0.000000e+00> : vector<32x16xf32>
    %35 = tpu.matmul %34, %32, %cst_36 {dimension_numbers = #tpu.dot_dimension_numbers<[1], [0], [0], [1], [0, 0, 1, 1], [], []>} : vector<32x4xf32>, vector<4x16xf32>, vector<32x16xf32> -> vector<32x16xf32>
    %36 = arith.addf %30, %35 : vector<32x16xf32>
    %c1_37 = arith.constant 1 : index
    %c0_38 = arith.constant 0 : index
    %c2_39 = arith.constant 2 : index
    %37 = vector.load %arg1[%c1_37, %c0_38, %c2_39] : memref<2x4x18xf32, #tpu.memory_space<vmem>>, vector<1x4x16xf32>
    %38 = vector.shape_cast %37 : vector<1x4x16xf32> to vector<4x16xf32>
    %c2_40 = arith.constant 2 : index
    %c0_41 = arith.constant 0 : index
    %c0_42 = arith.constant 0 : index
    %39 = vector.load %arg2[%c2_40, %c0_41, %c0_42] : memref<3x32x4xf32, #tpu.memory_space<vmem>>, vector<1x32x4xf32>
    %40 = vector.shape_cast %39 : vector<1x32x4xf32> to vector<32x4xf32>
    %cst_43 = arith.constant dense<0.000000e+00> : vector<32x16xf32>
    %41 = tpu.matmul %40, %38, %cst_43 {dimension_numbers = #tpu.dot_dimension_numbers<[1], [0], [0], [1], [0, 0, 1, 1], [], []>} : vector<32x4xf32>, vector<4x16xf32>, vector<32x16xf32> -> vector<32x16xf32>
    %42 = arith.addf %36, %41 : vector<32x16xf32>
    %43 = vector.broadcast %0 : vector<32x1xf32> to vector<32x16xf32>
    %44 = arith.addf %42, %43 : vector<32x16xf32>
    %cst_44 = arith.constant 0.00999999977 : f32
    %45 = vector.broadcast %cst_44 : f32 to vector<32x16xf32>
    %46 = arith.mulf %45, %44 : vector<32x16xf32>
    %47 = arith.maximumf %44, %46 : vector<32x16xf32>
    %c1_45 = arith.constant 1 : index
    %c0_46 = arith.constant 0 : index
    %c0_47 = arith.constant 0 : index
    %48 = vector.load %arg4[%c1_45, %c0_46, %c0_47] : memref<2x32x16xf32, #tpu.memory_space<vmem>>, vector<1x32x16xf32>
    %49 = vector.shape_cast %48 : vector<1x32x16xf32> to vector<32x16xf32>
    %50 = vector.shape_cast %47 : vector<32x16xf32> to vector<1x32x16xf32>
    tpu.vector_store %arg4[%c1_45, %c0_46, %c0_47], %50 {strides = array<i32>} : memref<2x32x16xf32, #tpu.memory_space<vmem>>, vector<1x32x16xf32>,
    return
  }
  func.func @transform_0(%arg0: i32) -> (i32, i32, i32) {
    %c0_i32 = arith.constant 0 : i32
    %c0_i32_0 = arith.constant 0 : i32
    %c0_i32_1 = arith.constant 0 : i32
    return %arg0, %c0_i32, %c0_i32_0 : i32, i32, i32
  }
  func.func @transform_1(%arg0: i32) -> (i32, i32, i32) {
    %c0_i32 = arith.constant 0 : i32
    %c0_i32_0 = arith.constant 0 : i32
    %c0_i32_1 = arith.constant 0 : i32
    %c0_i32_2 = arith.constant 0 : i32
    return %c0_i32, %c0_i32_0, %c0_i32_1 : i32, i32, i32
  }
  func.func @transform_2(%arg0: i32) -> (i32, i32) {
    %c0_i32 = arith.constant 0 : i32
    %c0_i32_0 = arith.constant 0 : i32
    %c0_i32_1 = arith.constant 0 : i32
    return %c0_i32, %c0_i32_0 : i32, i32
  }
  func.func @transform_3(%arg0: i32) -> (i32, i32, i32) {
    %c0_i32 = arith.constant 0 : i32
    %c0_i32_0 = arith.constant 0 : i32
    %c0_i32_1 = arith.constant 0 : i32
    return %arg0, %c0_i32, %c0_i32_0 : i32, i32, i32
  }
}

</mosaic_0001>

<llo_original>
// kernel: tpu_custom_call.1
$region0: #{tpu_custom_call.1}
  #allocation0 [shape = 'u32[]', space=smem, size = 0x4, offset = 0x4, fixed_abs, tag = 'smem constant byte address 0x4 - core index']
  #allocation1 [shape = 'u32[144,128]{1,0:T(1,128)}', space=vmem, size = 0x12000, scoped, tag = 'internal scratch']
  %s0 = inlined_call_operand.vmem [shape: f32[2,4,18], index: 0, kind: input, shape index: {}]
  %s1 = inlined_call_operand.vmem [shape: f32[3,32,4], index: 1, kind: input, shape index: {}]
  %s2 = inlined_call_operand.vmem [shape: f32[32,1], index: 2, kind: input, shape index: {}]
  %s3 = inlined_call_operand.vmem [shape: f32[2,32,16], index: 3, kind: output, shape index: {}]
  %s4 = sld [smem:[#allocation0]]
  $region22: #{tpu_custom_call.1} parent=0
    _
  %s6 = ssub.s32 1, %s4
  %s7 = scalar_select 0, %s6, %s4
  // Predicated region
  $region2: #{tpu_custom_call.1} parent=0 // pred_check
    _
  $region3: #{tpu_custom_call.1} parent=0 // pred_check_branch
    %9 = sbr.rel (0) target = $region5
  $region4: #{tpu_custom_call.1} parent=0 // pred_region
    _
  $region5: #{tpu_custom_call.1} parent=0 // pred_fallthru
    _
  // Predicated region
  $region6: #{tpu_custom_call.1} parent=0 // pred_check
    _
  $region7: #{tpu_custom_call.1} parent=0 // pred_check_branch
    %11 = sbr.rel (0) target = $region9
  $region8: #{tpu_custom_call.1} parent=0 // pred_region
    _
  $region9: #{tpu_custom_call.1} parent=0 // pred_fallthru
    _
  // Predicated region
  $region10: #{tpu_custom_call.1} parent=0 // pred_check
    _
  $region11: #{tpu_custom_call.1} parent=0 // pred_check_branch
    %13 = sbr.rel (0) target = $region13
  $region12: #{tpu_custom_call.1} parent=0 // pred_region
    _
  $region13: #{tpu_custom_call.1} parent=0 // pred_fallthru
    _
  %v14 = vld [vmem:[%s2] sm:$0xff]
  %v15 = vld [vmem:[%s2 + $0x8] sm:$0xff]
  %v16 = vld [vmem:[%s2 + $0x10] sm:$0xff]
  %v17 = vld [vmem:[%s2 + $0x18] sm:$0xff]
  %v18 = vld [vmem:[%s0] sm:$0xf]
  %v19 = vld [vmem:[%s1] sm:$0xff]
  %v20 = vld [vmem:[%s1 + $0x8] sm:$0xff]
  %v21 = vld [vmem:[%s1 + $0x10] sm:$0xff]
  %v22 = vld [vmem:[%s1 + $0x18] sm:$0xff]
  %s23 = scalar_lea.vmem %s1, 32
  %v24 = vld [vmem:[%s23] sm:$0xff]
  %v25 = vld [vmem:[%s23 + $0x8] sm:$0xff]
  %v26 = vld [vmem:[%s23 + $0x10] sm:$0xff]
  %v27 = vld [vmem:[%s23 + $0x18] sm:$0xff]
  %29 = vrot.lane.b32.xlu0 %v18, 127
  %v30 = vpop.permute.xlu0 %29
  %vm31 = vcmask 31744
  %v33 = vsel %vm31, %v24, 0
  %v36 = vsel %vm31, %v25, 0
  %v39 = vsel %vm31, %v26, 0
  %v42 = vsel %vm31, %v27, 0
  %vm44 = vcmask 1043456
  %v45 = vsel %vm44, %v30, 0
  %47 = vmatprep.subr.mxu0 0.0
  %48 = vmatpush1.msra.mxu0 0.0
  %49 = vmatprep.subr.mxu0 0.0
  %50 = vmatpush1.msra.mxu0 0.0
  %51 = vmatprep.subr.mxu0 0.0
  %52 = vmatpush1.msra.mxu0 0.0
  %53 = vmatprep.subr.mxu0 0.0
  %54 = vmatpush1.msra.mxu0 0.0
  %55 = vmatprep.subr.mxu0 0.0
  %56 = vmatpush1.msra.mxu0 0.0
  %57 = vmatprep.subr.mxu0 0.0
  %58 = vmatpush1.msra.mxu0 0.0
  %59 = vmatprep.subr.mxu0 0.0
  %60 = vmatpush1.msra.mxu0 0.0
  %61 = vmatprep.subr.mxu0 0.0
  %62 = vmatpush1.msra.mxu0 0.0
  %63 = vmatprep.subr.mxu0 0.0
  %64 = vmatpush1.msra.mxu0 0.0
  %65 = vmatprep.subr.mxu0 0.0
  %66 = vmatpush1.msra.mxu0 0.0
  %67 = vmatprep.subr.mxu0 0.0
  %68 = vmatpush1.msra.mxu0 0.0
  %69 = vmatprep.subr.mxu0 0.0
  %70 = vmatpush1.msra.mxu0 0.0
  %71 = vmatprep.subr.mxu0 0.0
  %72 = vmatpush1.msra.mxu0 0.0
  %73 = vmatprep.subr.mxu0 0.0
  %74 = vmatpush1.msra.mxu0 0.0
  %75 = vmatprep.subr.mxu0 0.0
  %76 = vmatpush1.msra.mxu0 0.0
  %77 = vmatprep.subr.mxu0 0.0
  %78 = vmatpush1.msra.mxu0 %v45
  %79 = vmatprep.subr.mxu0 0.0
  %80 = vmatpush2.msra.mxu0 0.0
  %81 = vmatprep.subr.mxu0 0.0
  %82 = vmatpush2.msra.mxu0 0.0
  %83 = vmatprep.subr.mxu0 0.0
  %84 = vmatpush2.msra.mxu0 0.0
  %85 = vmatprep.subr.mxu0 0.0
  %86 = vmatpush2.msra.mxu0 0.0
  %87 = vmatprep.subr.mxu0 0.0
  %88 = vmatpush2.msra.mxu0 0.0
  %89 = vmatprep.subr.mxu0 0.0
  %90 = vmatpush2.msra.mxu0 0.0
  %91 = vmatprep.subr.mxu0 0.0
  %92 = vmatpush2.msra.mxu0 0.0
  %93 = vmatprep.subr.mxu0 0.0
  %94 = vmatpush2.msra.mxu0 0.0
  %95 = vmatprep.subr.mxu0 0.0
  %96 = vmatpush2.msra.mxu0 0.0
  %97 = vmatprep.subr.mxu0 0.0
  %98 = vmatpush2.msra.mxu0 0.0
  %99 = vmatprep.subr.mxu0 0.0
  %100 = vmatpush2.msra.mxu0 0.0
  %101 = vmatprep.subr.mxu0 0.0
  %102 = vmatpush2.msra.mxu0 0.0
  %103 = vmatprep.subr.mxu0 0.0
  %104 = vmatpush2.msra.mxu0 0.0
  %105 = vmatprep.subr.mxu0 0.0
  %106 = vmatpush2.msra.mxu0 0.0
  %107 = vmatprep.subr.mxu0 0.0
  %108 = vmatpush2.msra.mxu0 0.0
  %109 = vmatprep.subr.mxu0 0.0
  %110 = vmatpush2.msra.mxu0 0.0
  %111 = vmatprep.mubr.f32.mxu0 0.0
  %112 = vmatmul.mubr.f32.gmra.mxu0 %v33
  %v113 = vpop.f32.mrf.mxu0
  %v114 = vadd.f32 0.0, %v113
  %v115 = vpop.f32.mrf.mxu0
  %116 = vmatprep.mubr.f32.mxu0 0.0
  %117 = vmatmul.mubr.f32.gmra.mxu0 %v36
  %v118 = vpop.f32.mrf.mxu0
  %v119 = vadd.f32 0.0, %v118
  %v120 = vpop.f32.mrf.mxu0
  %121 = vmatprep.mubr.f32.mxu0 0.0
  %122 = vmatmul.mubr.f32.gmra.mxu0 %v39
  %v123 = vpop.f32.mrf.mxu0
  %v124 = vadd.f32 0.0, %v123
  %v125 = vpop.f32.mrf.mxu0
  %126 = vmatprep.mubr.f32.mxu0 0.0
  %127 = vmatmul.mubr.f32.gmra.mxu0 %v42
  %v128 = vpop.f32.mrf.mxu0
  %v129 = vadd.f32 0.0, %v128
  %v130 = vpop.f32.mrf.mxu0
  %131 = vdwg.mxu0
  %v133 = vsel %vm31, %v19, 0
  %v136 = vsel %vm31, %v20, 0
  %v139 = vsel %vm31, %v21, 0
  %v142 = vsel %vm31, %v22, 0
  %v144 = vsel %vm44, %v18, 0
  %146 = vmatprep.subr.mxu0 0.0
  %147 = vmatpush1.msra.mxu0 0.0
  %148 = vmatprep.subr.mxu0 0.0
  %149 = vmatpush1.msra.mxu0 0.0
  %150 = vmatprep.subr.mxu0 0.0
  %151 = vmatpush1.msra.mxu0 0.0
  %152 = vmatprep.subr.mxu0 0.0
  %153 = vmatpush1.msra.mxu0 0.0
  %154 = vmatprep.subr.mxu0 0.0
  %155 = vmatpush1.msra.mxu0 0.0
  %156 = vmatprep.subr.mxu0 0.0
  %157 = vmatpush1.msra.mxu0 0.0
  %158 = vmatprep.subr.mxu0 0.0
  %159 = vmatpush1.msra.mxu0 0.0
  %160 = vmatprep.subr.mxu0 0.0
  %161 = vmatpush1.msra.mxu0 0.0
  %162 = vmatprep.subr.mxu0 0.0
  %163 = vmatpush1.msra.mxu0 0.0
  %164 = vmatprep.subr.mxu0 0.0
  %165 = vmatpush1.msra.mxu0 0.0
  %166 = vmatprep.subr.mxu0 0.0
  %167 = vmatpush1.msra.mxu0 0.0
  %168 = vmatprep.subr.mxu0 0.0
  %169 = vmatpush1.msra.mxu0 0.0
  %170 = vmatprep.subr.mxu0 0.0
  %171 = vmatpush1.msra.mxu0 0.0
  %172 = vmatprep.subr.mxu0 0.0
  %173 = vmatpush1.msra.mxu0 0.0
  %174 = vmatprep.subr.mxu0 0.0
  %175 = vmatpush1.msra.mxu0 0.0
  %176 = vmatprep.subr.mxu0 0.0
  %177 = vmatpush1.msra.mxu0 %v144
  %178 = vmatprep.subr.mxu0 0.0
  %179 = vmatpush2.msra.mxu0 0.0
  %180 = vmatprep.subr.mxu0 0.0
  %181 = vmatpush2.msra.mxu0 0.0
  %182 = vmatprep.subr.mxu0 0.0
  %183 = vmatpush2.msra.mxu0 0.0
  %184 = vmatprep.subr.mxu0 0.0
  %185 = vmatpush2.msra.mxu0 0.0
  %186 = vmatprep.subr.mxu0 0.0
  %187 = vmatpush2.msra.mxu0 0.0
  %188 = vmatprep.subr.mxu0 0.0
  %189 = vmatpush2.msra.mxu0 0.0
  %190 = vmatprep.subr.mxu0 0.0
  %191 = vmatpush2.msra.mxu0 0.0
  %192 = vmatprep.subr.mxu0 0.0
  %193 = vmatpush2.msra.mxu0 0.0
  %194 = vmatprep.subr.mxu0 0.0
  %195 = vmatpush2.msra.mxu0 0.0
  %196 = vmatprep.subr.mxu0 0.0
  %197 = vmatpush2.msra.mxu0 0.0
  %198 = vmatprep.subr.mxu0 0.0
  %199 = vmatpush2.msra.mxu0 0.0
  %200 = vmatprep.subr.mxu0 0.0
  %201 = vmatpush2.msra.mxu0 0.0
  %202 = vmatprep.subr.mxu0 0.0
  %203 = vmatpush2.msra.mxu0 0.0
  %204 = vmatprep.subr.mxu0 0.0
  %205 = vmatpush2.msra.mxu0 0.0
  %206 = vmatprep.subr.mxu0 0.0
  %207 = vmatpush2.msra.mxu0 0.0
  %208 = vmatprep.subr.mxu0 0.0
  %209 = vmatpush2.msra.mxu0 0.0
  %210 = vmatprep.mubr.f32.mxu0 0.0
  %211 = vmatmul.mubr.f32.gmra.mxu0 %v133
  %v212 = vpop.f32.mrf.mxu0
  %v213 = vadd.f32 %v114, %v212
  %v214 = vpop.f32.mrf.mxu0
  %215 = vmatprep.mubr.f32.mxu0 0.0
  %216 = vmatmul.mubr.f32.gmra.mxu0 %v136
  %v217 = vpop.f32.mrf.mxu0
  %v218 = vadd.f32 %v119, %v217
  %v219 = vpop.f32.mrf.mxu0
  %220 = vmatprep.mubr.f32.mxu0 0.0
  %221 = vmatmul.mubr.f32.gmra.mxu0 %v139
  %v222 = vpop.f32.mrf.mxu0
  %v223 = vadd.f32 %v124, %v222
  %v224 = vpop.f32.mrf.mxu0
  %225 = vmatprep.mubr.f32.mxu0 0.0
  %226 = vmatmul.mubr.f32.gmra.mxu0 %v142
  %v227 = vpop.f32.mrf.mxu0
  %v228 = vadd.f32 %v129, %v227
  %v229 = vpop.f32.mrf.mxu0
  %230 = vdwg.mxu0
  %s231 = scalar_lea.vmem %s1, 64
  %v232 = vld [vmem:[%s231] sm:$0xff]
  %v233 = vld [vmem:[%s231 + $0x8] sm:$0xff]
  %v234 = vld [vmem:[%s231 + $0x10] sm:$0xff]
  %v235 = vld [vmem:[%s231 + $0x18] sm:$0xff]
  %236 = vrot.lane.b32.xlu0 %v18, 126
  %v237 = vpop.permute.xlu0 %236
  %v239 = vsel %vm31, %v232, 0
  %v242 = vsel %vm31, %v233, 0
  %v245 = vsel %vm31, %v234, 0
  %v248 = vsel %vm31, %v235, 0
  %v250 = vsel %vm44, %v237, 0
  %252 = vmatprep.subr.mxu0 0.0
  %253 = vmatpush1.msra.mxu0 0.0
  %254 = vmatprep.subr.mxu0 0.0
  %255 = vmatpush1.msra.mxu0 0.0
  %256 = vmatprep.subr.mxu0 0.0
  %257 = vmatpush1.msra.mxu0 0.0
  %258 = vmatprep.subr.mxu0 0.0
  %259 = vmatpush1.msra.mxu0 0.0
  %260 = vmatprep.subr.mxu0 0.0
  %261 = vmatpush1.msra.mxu0 0.0
  %262 = vmatprep.subr.mxu0 0.0
  %263 = vmatpush1.msra.mxu0 0.0
  %264 = vmatprep.subr.mxu0 0.0
  %265 = vmatpush1.msra.mxu0 0.0
  %266 = vmatprep.subr.mxu0 0.0
  %267 = vmatpush1.msra.mxu0 0.0
  %268 = vmatprep.subr.mxu0 0.0
  %269 = vmatpush1.msra.mxu0 0.0
  %270 = vmatprep.subr.mxu0 0.0
  %271 = vmatpush1.msra.mxu0 0.0
  %272 = vmatprep.subr.mxu0 0.0
  %273 = vmatpush1.msra.mxu0 0.0
  %274 = vmatprep.subr.mxu0 0.0
  %275 = vmatpush1.msra.mxu0 0.0
  %276 = vmatprep.subr.mxu0 0.0
  %277 = vmatpush1.msra.mxu0 0.0
  %278 = vmatprep.subr.mxu0 0.0
  %279 = vmatpush1.msra.mxu0 0.0
  %280 = vmatprep.subr.mxu0 0.0
  %281 = vmatpush1.msra.mxu0 0.0
  %282 = vmatprep.subr.mxu0 0.0
  %283 = vmatpush1.msra.mxu0 %v250
  %284 = vmatprep.subr.mxu0 0.0
  %285 = vmatpush2.msra.mxu0 0.0
  %286 = vmatprep.subr.mxu0 0.0
  %287 = vmatpush2.msra.mxu0 0.0
  %288 = vmatprep.subr.mxu0 0.0
  %289 = vmatpush2.msra.mxu0 0.0
  %290 = vmatprep.subr.mxu0 0.0
  %291 = vmatpush2.msra.mxu0 0.0
  %292 = vmatprep.subr.mxu0 0.0
  %293 = vmatpush2.msra.mxu0 0.0
  %294 = vmatprep.subr.mxu0 0.0
  %295 = vmatpush2.msra.mxu0 0.0
  %296 = vmatprep.subr.mxu0 0.0
  %297 = vmatpush2.msra.mxu0 0.0
  %298 = vmatprep.subr.mxu0 0.0
  %299 = vmatpush2.msra.mxu0 0.0
  %300 = vmatprep.subr.mxu0 0.0
  %301 = vmatpush2.msra.mxu0 0.0
  %302 = vmatprep.subr.mxu0 0.0
  %303 = vmatpush2.msra.mxu0 0.0
  %304 = vmatprep.subr.mxu0 0.0
  %305 = vmatpush2.msra.mxu0 0.0
  %306 = vmatprep.subr.mxu0 0.0
  %307 = vmatpush2.msra.mxu0 0.0
  %308 = vmatprep.subr.mxu0 0.0
  %309 = vmatpush2.msra.mxu0 0.0
  %310 = vmatprep.subr.mxu0 0.0
  %311 = vmatpush2.msra.mxu0 0.0
  %312 = vmatprep.subr.mxu0 0.0
  %313 = vmatpush2.msra.mxu0 0.0
  %314 = vmatprep.subr.mxu0 0.0
  %315 = vmatpush2.msra.mxu0 0.0
  %316 = vmatprep.mubr.f32.mxu0 0.0
  %317 = vmatmul.mubr.f32.gmra.mxu0 %v239
  %v318 = vpop.f32.mrf.mxu0
  %v319 = vadd.f32 0.0, %v318
  %v320 = vpop.f32.mrf.mxu0
  %321 = vmatprep.mubr.f32.mxu0 0.0
  %322 = vmatmul.mubr.f32.gmra.mxu0 %v242
  %v323 = vpop.f32.mrf.mxu0
  %v324 = vadd.f32 0.0, %v323
  %v325 = vpop.f32.mrf.mxu0
  %326 = vmatprep.mubr.f32.mxu0 0.0
  %327 = vmatmul.mubr.f32.gmra.mxu0 %v245
  %v328 = vpop.f32.mrf.mxu0
  %v329 = vadd.f32 0.0, %v328
  %v330 = vpop.f32.mrf.mxu0
  %331 = vmatprep.mubr.f32.mxu0 0.0
  %332 = vmatmul.mubr.f32.gmra.mxu0 %v248
  %v333 = vpop.f32.mrf.mxu0
  %v334 = vadd.f32 0.0, %v333
  %v335 = vpop.f32.mrf.mxu0
  %336 = vdwg.mxu0
  %v337 = vadd.f32 %v213, %v319
  %v338 = vadd.f32 %v218, %v324
  %v339 = vadd.f32 %v223, %v329
  %v340 = vadd.f32 %v228, %v334
  %342 = vset.pattern.permute.xlu0 0
  %343 = vperm.xlu0 %342, %v14
  %v344 = vpop.permute.xlu0 %343
  %347 = vset.pattern.permute.xlu0 0
  %348 = vperm.xlu0 %347, %v15
  %v349 = vpop.permute.xlu0 %348
  %352 = vset.pattern.permute.xlu0 0
  %353 = vperm.xlu0 %352, %v16
  %v354 = vpop.permute.xlu0 %353
  %357 = vset.pattern.permute.xlu0 0
  %358 = vperm.xlu0 %357, %v17
  %v359 = vpop.permute.xlu0 %358
  %v361 = vadd.f32 %v337, %v344
  %v362 = vadd.f32 %v338, %v349
  %v363 = vadd.f32 %v339, %v354
  %v364 = vadd.f32 %v340, %v359
  %v365 = vmul.f32 %v361, 0.01
  %v366 = vmul.f32 %v362, 0.01
  %v367 = vmul.f32 %v363, 0.01
  %v368 = vmul.f32 %v364, 0.01
  %v369 = vmax.f32 %v361, %v365
  %v370 = vmax.f32 %v362, %v366
  %v371 = vmax.f32 %v363, %v367
  %v372 = vmax.f32 %v364, %v368
  %vm373 = vcmask 130048
  %374 = vst.msk [vmem:[%s3] sm:$0xff] %vm373, %v369
  %375 = vst.msk [vmem:[%s3 + $0x8] sm:$0xff] %vm373, %v370
  %376 = vst.msk [vmem:[%s3 + $0x10] sm:$0xff] %vm373, %v371
  %377 = vst.msk [vmem:[%s3 + $0x18] sm:$0xff] %vm373, %v372
  %s378 = scalar_lea.vmem %s0, 4
  %v379 = vld [vmem:[%s378] sm:$0xf]
  %v380 = vld [vmem:[%s1] sm:$0xff]
  %v381 = vld [vmem:[%s1 + $0x8] sm:$0xff]
  %v382 = vld [vmem:[%s1 + $0x10] sm:$0xff]
  %v383 = vld [vmem:[%s1 + $0x18] sm:$0xff]
  %v384 = vld [vmem:[%s23] sm:$0xff]
  %v385 = vld [vmem:[%s23 + $0x8] sm:$0xff]
  %v386 = vld [vmem:[%s23 + $0x10] sm:$0xff]
  %v387 = vld [vmem:[%s23 + $0x18] sm:$0xff]
  %389 = vrot.lane.b32.xlu0 %v379, 127
  %v390 = vpop.permute.xlu0 %389
  %v392 = vsel %vm31, %v384, 0
  %v395 = vsel %vm31, %v385, 0
  %v398 = vsel %vm31, %v386, 0
  %v401 = vsel %vm31, %v387, 0
  %v403 = vsel %vm44, %v390, 0
  %405 = vmatprep.subr.mxu0 0.0
  %406 = vmatpush1.msra.mxu0 0.0
  %407 = vmatprep.subr.mxu0 0.0
  %408 = vmatpush1.msra.mxu0 0.0
  %409 = vmatprep.subr.mxu0 0.0
  %410 = vmatpush1.msra.mxu0 0.0
  %411 = vmatprep.subr.mxu0 0.0
  %412 = vmatpush1.msra.mxu0 0.0
  %413 = vmatprep.subr.mxu0 0.0
  %414 = vmatpush1.msra.mxu0 0.0
  %415 = vmatprep.subr.mxu0 0.0
  %416 = vmatpush1.msra.mxu0 0.0
  %417 = vmatprep.subr.mxu0 0.0
  %418 = vmatpush1.msra.mxu0 0.0
  %419 = vmatprep.subr.mxu0 0.0
  %420 = vmatpush1.msra.mxu0 0.0
  %421 = vmatprep.subr.mxu0 0.0
  %422 = vmatpush1.msra.mxu0 0.0
  %423 = vmatprep.subr.mxu0 0.0
  %424 = vmatpush1.msra.mxu0 0.0
  %425 = vmatprep.subr.mxu0 0.0
  %426 = vmatpush1.msra.mxu0 0.0
  %427 = vmatprep.subr.mxu0 0.0
  %428 = vmatpush1.msra.mxu0 0.0
  %429 = vmatprep.subr.mxu0 0.0
  %430 = vmatpush1.msra.mxu0 0.0
  %431 = vmatprep.subr.mxu0 0.0
  %432 = vmatpush1.msra.mxu0 0.0
  %433 = vmatprep.subr.mxu0 0.0
  %434 = vmatpush1.msra.mxu0 0.0
  %435 = vmatprep.subr.mxu0 0.0
  %436 = vmatpush1.msra.mxu0 %v403
  %437 = vmatprep.subr.mxu0 0.0
  %438 = vmatpush2.msra.mxu0 0.0
  %439 = vmatprep.subr.mxu0 0.0
  %440 = vmatpush2.msra.mxu0 0.0
  %441 = vmatprep.subr.mxu0 0.0
  %442 = vmatpush2.msra.mxu0 0.0
  %443 = vmatprep.subr.mxu0 0.0
  %444 = vmatpush2.msra.mxu0 0.0
  %445 = vmatprep.subr.mxu0 0.0
  %446 = vmatpush2.msra.mxu0 0.0
  %447 = vmatprep.subr.mxu0 0.0
  %448 = vmatpush2.msra.mxu0 0.0
  %449 = vmatprep.subr.mxu0 0.0
  %450 = vmatpush2.msra.mxu0 0.0
  %451 = vmatprep.subr.mxu0 0.0
  %452 = vmatpush2.msra.mxu0 0.0
  %453 = vmatprep.subr.mxu0 0.0
  %454 = vmatpush2.msra.mxu0 0.0
  %455 = vmatprep.subr.mxu0 0.0
  %456 = vmatpush2.msra.mxu0 0.0
  %457 = vmatprep.subr.mxu0 0.0
  %458 = vmatpush2.msra.mxu0 0.0
  %459 = vmatprep.subr.mxu0 0.0
  %460 = vmatpush2.msra.mxu0 0.0
  %461 = vmatprep.subr.mxu0 0.0
  %462 = vmatpush2.msra.mxu0 0.0
  %463 = vmatprep.subr.mxu0 0.0
  %464 = vmatpush2.msra.mxu0 0.0
  %465 = vmatprep.subr.mxu0 0.0
  %466 = vmatpush2.msra.mxu0 0.0
  %467 = vmatprep.subr.mxu0 0.0
  %468 = vmatpush2.msra.mxu0 0.0
  %469 = vmatprep.mubr.f32.mxu0 0.0
  %470 = vmatmul.mubr.f32.gmra.mxu0 %v392
  %v471 = vpop.f32.mrf.mxu0
  %v472 = vadd.f32 0.0, %v471
  %v473 = vpop.f32.mrf.mxu0
  %474 = vmatprep.mubr.f32.mxu0 0.0
  %475 = vmatmul.mubr.f32.gmra.mxu0 %v395
  %v476 = vpop.f32.mrf.mxu0
  %v477 = vadd.f32 0.0, %v476
  %v478 = vpop.f32.mrf.mxu0
  %479 = vmatprep.mubr.f32.mxu0 0.0
  %480 = vmatmul.mubr.f32.gmra.mxu0 %v398
  %v481 = vpop.f32.mrf.mxu0
  %v482 = vadd.f32 0.0, %v481
  %v483 = vpop.f32.mrf.mxu0
  %484 = vmatprep.mubr.f32.mxu0 0.0
  %485 = vmatmul.mubr.f32.gmra.mxu0 %v401
  %v486 = vpop.f32.mrf.mxu0
  %v487 = vadd.f32 0.0, %v486
  %v488 = vpop.f32.mrf.mxu0
  %489 = vdwg.mxu0
  %v491 = vsel %vm31, %v380, 0
  %v494 = vsel %vm31, %v381, 0
  %v497 = vsel %vm31, %v382, 0
  %v500 = vsel %vm31, %v383, 0
  %v502 = vsel %vm44, %v379, 0
  %504 = vmatprep.subr.mxu0 0.0
  %505 = vmatpush1.msra.mxu0 0.0
  %506 = vmatprep.subr.mxu0 0.0
  %507 = vmatpush1.msra.mxu0 0.0
  %508 = vmatprep.subr.mxu0 0.0
  %509 = vmatpush1.msra.mxu0 0.0
  %510 = vmatprep.subr.mxu0 0.0
  %511 = vmatpush1.msra.mxu0 0.0
  %512 = vmatprep.subr.mxu0 0.0
  %513 = vmatpush1.msra.mxu0 0.0
  %514 = vmatprep.subr.mxu0 0.0
  %515 = vmatpush1.msra.mxu0 0.0
  %516 = vmatprep.subr.mxu0 0.0
  %517 = vmatpush1.msra.mxu0 0.0
  %518 = vmatprep.subr.mxu0 0.0
  %519 = vmatpush1.msra.mxu0 0.0
  %520 = vmatprep.subr.mxu0 0.0
  %521 = vmatpush1.msra.mxu0 0.0
  %522 = vmatprep.subr.mxu0 0.0
  %523 = vmatpush1.msra.mxu0 0.0
  %524 = vmatprep.subr.mxu0 0.0
  %525 = vmatpush1.msra.mxu0 0.0
  %526 = vmatprep.subr.mxu0 0.0
  %527 = vmatpush1.msra.mxu0 0.0
  %528 = vmatprep.subr.mxu0 0.0
  %529 = vmatpush1.msra.mxu0 0.0
  %530 = vmatprep.subr.mxu0 0.0
  %531 = vmatpush1.msra.mxu0 0.0
  %532 = vmatprep.subr.mxu0 0.0
  %533 = vmatpush1.msra.mxu0 0.0
  %534 = vmatprep.subr.mxu0 0.0
  %535 = vmatpush1.msra.mxu0 %v502
  %536 = vmatprep.subr.mxu0 0.0
  %537 = vmatpush2.msra.mxu0 0.0
  %538 = vmatprep.subr.mxu0 0.0
  %539 = vmatpush2.msra.mxu0 0.0
  %540 = vmatprep.subr.mxu0 0.0
  %541 = vmatpush2.msra.mxu0 0.0
  %542 = vmatprep.subr.mxu0 0.0
  %543 = vmatpush2.msra.mxu0 0.0
  %544 = vmatprep.subr.mxu0 0.0
  %545 = vmatpush2.msra.mxu0 0.0
  %546 = vmatprep.subr.mxu0 0.0
  %547 = vmatpush2.msra.mxu0 0.0
  %548 = vmatprep.subr.mxu0 0.0
  %549 = vmatpush2.msra.mxu0 0.0
  %550 = vmatprep.subr.mxu0 0.0
  %551 = vmatpush2.msra.mxu0 0.0
  %552 = vmatprep.subr.mxu0 0.0
  %553 = vmatpush2.msra.mxu0 0.0
  %554 = vmatprep.subr.mxu0 0.0
  %555 = vmatpush2.msra.mxu0 0.0
  %556 = vmatprep.subr.mxu0 0.0
  %557 = vmatpush2.msra.mxu0 0.0
  %558 = vmatprep.subr.mxu0 0.0
  %559 = vmatpush2.msra.mxu0 0.0
  %560 = vmatprep.subr.mxu0 0.0
  %561 = vmatpush2.msra.mxu0 0.0
  %562 = vmatprep.subr.mxu0 0.0
  %563 = vmatpush2.msra.mxu0 0.0
  %564 = vmatprep.subr.mxu0 0.0
  %565 = vmatpush2.msra.mxu0 0.0
  %566 = vmatprep.subr.mxu0 0.0
  %567 = vmatpush2.msra.mxu0 0.0
  %568 = vmatprep.mubr.f32.mxu0 0.0
  %569 = vmatmul.mubr.f32.gmra.mxu0 %v491
  %v570 = vpop.f32.mrf.mxu0
  %v571 = vadd.f32 %v472, %v570
  %v572 = vpop.f32.mrf.mxu0
  %573 = vmatprep.mubr.f32.mxu0 0.0
  %574 = vmatmul.mubr.f32.gmra.mxu0 %v494
  %v575 = vpop.f32.mrf.mxu0
  %v576 = vadd.f32 %v477, %v575
  %v577 = vpop.f32.mrf.mxu0
  %578 = vmatprep.mubr.f32.mxu0 0.0
  %579 = vmatmul.mubr.f32.gmra.mxu0 %v497
  %v580 = vpop.f32.mrf.mxu0
  %v581 = vadd.f32 %v482, %v580
  %v582 = vpop.f32.mrf.mxu0
  %583 = vmatprep.mubr.f32.mxu0 0.0
  %584 = vmatmul.mubr.f32.gmra.mxu0 %v500
  %v585 = vpop.f32.mrf.mxu0
  %v586 = vadd.f32 %v487, %v585
  %v587 = vpop.f32.mrf.mxu0
  %588 = vdwg.mxu0
  %v589 = vld [vmem:[%s231] sm:$0xff]
  %v590 = vld [vmem:[%s231 + $0x8] sm:$0xff]
  %v591 = vld [vmem:[%s231 + $0x10] sm:$0xff]
  %v592 = vld [vmem:[%s231 + $0x18] sm:$0xff]
  %593 = vrot.lane.b32.xlu0 %v379, 126
  %v594 = vpop.permute.xlu0 %593
  %v596 = vsel %vm31, %v589, 0
  %v599 = vsel %vm31, %v590, 0
  %v602 = vsel %vm31, %v591, 0
  %v605 = vsel %vm31, %v592, 0
  %v607 = vsel %vm44, %v594, 0
  %609 = vmatprep.subr.mxu0 0.0
  %610 = vmatpush1.msra.mxu0 0.0
  %611 = vmatprep.subr.mxu0 0.0
  %612 = vmatpush1.msra.mxu0 0.0
  %613 = vmatprep.subr.mxu0 0.0
  %614 = vmatpush1.msra.mxu0 0.0
  %615 = vmatprep.subr.mxu0 0.0
  %616 = vmatpush1.msra.mxu0 0.0
  %617 = vmatprep.subr.mxu0 0.0
  %618 = vmatpush1.msra.mxu0 0.0
  %619 = vmatprep.subr.mxu0 0.0
  %620 = vmatpush1.msra.mxu0 0.0
  %621 = vmatprep.subr.mxu0 0.0
  %622 = vmatpush1.msra.mxu0 0.0
  %623 = vmatprep.subr.mxu0 0.0
  %624 = vmatpush1.msra.mxu0 0.0
  %625 = vmatprep.subr.mxu0 0.0
  %626 = vmatpush1.msra.mxu0 0.0
  %627 = vmatprep.subr.mxu0 0.0
  %628 = vmatpush1.msra.mxu0 0.0
  %629 = vmatprep.subr.mxu0 0.0
  %630 = vmatpush1.msra.mxu0 0.0
  %631 = vmatprep.subr.mxu0 0.0
  %632 = vmatpush1.msra.mxu0 0.0
  %633 = vmatprep.subr.mxu0 0.0
  %634 = vmatpush1.msra.mxu0 0.0
  %635 = vmatprep.subr.mxu0 0.0
  %636 = vmatpush1.msra.mxu0 0.0
  %637 = vmatprep.subr.mxu0 0.0
  %638 = vmatpush1.msra.mxu0 0.0
  %639 = vmatprep.subr.mxu0 0.0
  %640 = vmatpush1.msra.mxu0 %v607
  %641 = vmatprep.subr.mxu0 0.0
  %642 = vmatpush2.msra.mxu0 0.0
  %643 = vmatprep.subr.mxu0 0.0
  %644 = vmatpush2.msra.mxu0 0.0
  %645 = vmatprep.subr.mxu0 0.0
  %646 = vmatpush2.msra.mxu0 0.0
  %647 = vmatprep.subr.mxu0 0.0
  %648 = vmatpush2.msra.mxu0 0.0
  %649 = vmatprep.subr.mxu0 0.0
  %650 = vmatpush2.msra.mxu0 0.0
  %651 = vmatprep.subr.mxu0 0.0
  %652 = vmatpush2.msra.mxu0 0.0
  %653 = vmatprep.subr.mxu0 0.0
  %654 = vmatpush2.msra.mxu0 0.0
  %655 = vmatprep.subr.mxu0 0.0
  %656 = vmatpush2.msra.mxu0 0.0
  %657 = vmatprep.subr.mxu0 0.0
  %658 = vmatpush2.msra.mxu0 0.0
  %659 = vmatprep.subr.mxu0 0.0
  %660 = vmatpush2.msra.mxu0 0.0
  %661 = vmatprep.subr.mxu0 0.0
  %662 = vmatpush2.msra.mxu0 0.0
  %663 = vmatprep.subr.mxu0 0.0
  %664 = vmatpush2.msra.mxu0 0.0
  %665 = vmatprep.subr.mxu0 0.0
  %666 = vmatpush2.msra.mxu0 0.0
  %667 = vmatprep.subr.mxu0 0.0
  %668 = vmatpush2.msra.mxu0 0.0
  %669 = vmatprep.subr.mxu0 0.0
  %670 = vmatpush2.msra.mxu0 0.0
  %671 = vmatprep.subr.mxu0 0.0
  %672 = vmatpush2.msra.mxu0 0.0
  %673 = vmatprep.mubr.f32.mxu0 0.0
  %674 = vmatmul.mubr.f32.gmra.mxu0 %v596
  %v675 = vpop.f32.mrf.mxu0
  %v676 = vadd.f32 0.0, %v675
  %v677 = vpop.f32.mrf.mxu0
  %678 = vmatprep.mubr.f32.mxu0 0.0
  %679 = vmatmul.mubr.f32.gmra.mxu0 %v599
  %v680 = vpop.f32.mrf.mxu0
  %v681 = vadd.f32 0.0, %v680
  %v682 = vpop.f32.mrf.mxu0
  %683 = vmatprep.mubr.f32.mxu0 0.0
  %684 = vmatmul.mubr.f32.gmra.mxu0 %v602
  %v685 = vpop.f32.mrf.mxu0
  %v686 = vadd.f32 0.0, %v685
  %v687 = vpop.f32.mrf.mxu0
  %688 = vmatprep.mubr.f32.mxu0 0.0
  %689 = vmatmul.mubr.f32.gmra.mxu0 %v605
  %v690 = vpop.f32.mrf.mxu0
  %v691 = vadd.f32 0.0, %v690
  %v692 = vpop.f32.mrf.mxu0
  %693 = vdwg.mxu0
  %v694 = vadd.f32 %v571, %v676
  %v695 = vadd.f32 %v576, %v681
  %v696 = vadd.f32 %v581, %v686
  %v697 = vadd.f32 %v586, %v691
  %v698 = vadd.f32 %v694, %v344
  %v699 = vadd.f32 %v695, %v349
  %v700 = vadd.f32 %v696, %v354
  %v701 = vadd.f32 %v697, %v359
  %v702 = vmul.f32 %v698, 0.01
  %v703 = vmul.f32 %v699, 0.01
  %v704 = vmul.f32 %v700, 0.01
  %v705 = vmul.f32 %v701, 0.01
  %v706 = vmax.f32 %v698, %v702
  %v707 = vmax.f32 %v699, %v703
  %v708 = vmax.f32 %v700, %v704
  %v709 = vmax.f32 %v701, %v705
  %s710 = scalar_lea.vmem %s3, 32
  %711 = vst.msk [vmem:[%s710] sm:$0xff] %vm373, %v706
  %712 = vst.msk [vmem:[%s710 + $0x8] sm:$0xff] %vm373, %v707
  %713 = vst.msk [vmem:[%s710 + $0x10] sm:$0xff] %vm373, %v708
  %714 = vst.msk [vmem:[%s710 + $0x18] sm:$0xff] %vm373, %v709
  // Predicated region
  $region14: #{tpu_custom_call.1} parent=0 // pred_check
    _
  $region15: #{tpu_custom_call.1} parent=0 // pred_check_branch
    %716 = sbr.rel (0) target = $region17
  $region16: #{tpu_custom_call.1} parent=0 // pred_region
    _
  $region17: #{tpu_custom_call.1} parent=0 // pred_fallthru
    _
  // Predicated region
  $region18: #{tpu_custom_call.1} parent=0 // pred_check
    _
  $region19: #{tpu_custom_call.1} parent=0 // pred_check_branch
    %718 = sbr.rel (0) target = $region21
  $region20: #{tpu_custom_call.1} parent=0 // pred_region
    _
  $region21: #{tpu_custom_call.1} parent=0 // pred_fallthru
    _

</llo_original>
